<compile_context>
chip_gen: v6e
topology: v6e:2x2x1
jax: 0.10.0
libtpu: 0.0.40
codegen_flags: <defaults>
</compile_context>

<pallas_src>
import jax
import jax.numpy as jnp
from jax.experimental import pallas as pl
from jax.experimental.pallas import tpu as pltpu


def _round_up(x, m):
    return (x + m - 1) // m * m


def two_layer_kernel(x_ref, w1t_ref, w2t_ref, o_ref):
    # Two MXU matmuls (bf16 in, f32 accumulate) + VPU clamp(min=0), fused.
    x = x_ref[...]                    # (tm, D_in_p)   compute dtype (bf16)
    w1t = w1t_ref[...]                # (D_in_p, H_p)  compute dtype
    w2t = w2t_ref[...]                # (H_p, D_out_p) compute dtype

    h = jnp.dot(x, w1t, preferred_element_type=jnp.float32)       # (tm, H_p) f32
    h = jnp.maximum(h, 0.0)                                        # clamp(min=0)
    h = h.astype(w2t.dtype)                                        # back to bf16 for the MXU
    y = jnp.dot(h, w2t, preferred_element_type=jnp.float32)        # (tm, D_out_p) f32
    o_ref[...] = y.astype(o_ref.dtype)


def two_layer_net(x, w1, w2, *, compute_dtype=jnp.bfloat16, tm_max=512):
    """y = relu(x @ w1.T) @ w2.T with torch.nn.Linear weight convention."""
    N, D_in = x.shape
    H, D_in_w = w1.shape
    D_out, H_w = w2.shape
    assert D_in_w == D_in and H_w == H

    # Lane-dense padding: feature dims -> multiples of 128, rows -> multiple of 8.
    D_in_p = _round_up(D_in, 128)
    H_p = _round_up(H, 128)
    D_out_p = _round_up(D_out, 128)

    tm = min(tm_max, _round_up(N, 8))     # single step for small N, 512-row tiles otherwise
    N_p = _round_up(N, tm)

    itemsize = jnp.dtype(compute_dtype).itemsize

    # Hoisted transposes + zero padding + bf16 cast (done once, outside the grid loop).
    x_p = jnp.zeros((N_p, D_in_p), compute_dtype).at[:N, :D_in].set(
        x.astype(compute_dtype))
    w1t = jnp.zeros((D_in_p, H_p), compute_dtype).at[:D_in, :H].set(
        w1.T.astype(compute_dtype))
    w2t = jnp.zeros((H_p, D_out_p), compute_dtype).at[:H, :D_out].set(
        w2.T.astype(compute_dtype))

    flops = 2 * N_p * (D_in_p * H_p + H_p * D_out_p)
    bytes_accessed = (
        N_p * D_in_p * itemsize        # x
        + D_in_p * H_p * itemsize      # W1^T
        + H_p * D_out_p * itemsize     # W2^T
        + N_p * D_out_p * 4            # y (f32)
    )

    out = pl.pallas_call(
        two_layer_kernel,
        out_shape=jax.ShapeDtypeStruct((N_p, D_out_p), jnp.float32),
        grid_spec=pltpu.PrefetchScalarGridSpec(
            num_scalar_prefetch=0,
            grid=(N_p // tm,),
            in_specs=[
                pl.BlockSpec((tm, D_in_p), lambda i: (i, 0)),       # row tile of x
                pl.BlockSpec((D_in_p, H_p), lambda i: (0, 0)),      # resident W1^T
                pl.BlockSpec((H_p, D_out_p), lambda i: (0, 0)),     # resident W2^T
            ],
            out_specs=pl.BlockSpec((tm, D_out_p), lambda i: (i, 0)),
        ),
        compiler_params=pltpu.CompilerParams(
            dimension_semantics=("parallel",),
            vmem_limit_bytes=48 * 1024 * 1024,
        ),
        cost_estimate=pl.CostEstimate(
            flops=flops, transcendentals=0, bytes_accessed=bytes_accessed),
    )(x_p, w1t, w2t)

    # Strip padding; return in the input dtype.
    return out[:N, :D_out].astype(x.dtype)


if __name__ == "__main__":
    # Small shapes consistent with the module: N x D_in -> H -> D_out
    N, D_in, H, D_out = 16, 64, 32, 16

    key = jax.random.PRNGKey(0)
    kx, k1, k2 = jax.random.split(key, 3)

    x = jax.random.normal(kx, (N, D_in), dtype=jnp.float32)
    # Deterministic init mimicking torch.nn.Linear's U(-1/sqrt(fan_in), 1/sqrt(fan_in))
    w1 = jax.random.uniform(k1, (H, D_in), dtype=jnp.float32,
                            minval=-1.0 / (D_in ** 0.5), maxval=1.0 / (D_in ** 0.5))
    w2 = jax.random.uniform(k2, (D_out, H), dtype=jnp.float32,
                            minval=-1.0 / (H ** 0.5), maxval=1.0 / (H ** 0.5))

    y = two_layer_net(x, w1, w2)
    jax.block_until_ready(y)

    # Pure-JAX f32 reference (kernel uses bf16 MXU operands with f32 accumulation,
    # so allow a modest tolerance).
    y_ref = jnp.maximum(x @ w1.T, 0.0) @ w2.T
    assert y.shape == (N, D_out)
    assert jnp.allclose(y, y_ref, atol=3e-2, rtol=3e-2), float(
        jnp.max(jnp.abs(y - y_ref)))

    print("KERNEL_OK")
</pallas_src>

<mosaic_0001>
module attributes {stable_mosaic.version = 11 : i64} {
  func.func @two_layer_kernel(%arg0: i32, %arg1: memref<16x128xbf16, #tpu.memory_space<vmem>>, %arg2: memref<128x128xbf16, #tpu.memory_space<vmem>>, %arg3: memref<128x128xbf16, #tpu.memory_space<vmem>>, %arg4: memref<16x128xf32, #tpu.memory_space<vmem>>) attributes {dimension_semantics = [#tpu.dimension_semantics<parallel>], iteration_bounds = array<i64: 1>, scalar_prefetch = 0 : i64, scratch_operands = 0 : i64, tpu.core_type = #tpu.core_type<tc>, window_params = [{transform_indices = @transform_0, window_bounds = array<i64: 16, 128>}, {pipeline_mode = #tpu.pipeline_mode<synchronous>, transform_indices = @transform_1, window_bounds = array<i64: 128, 128>}, {pipeline_mode = #tpu.pipeline_mode<synchronous>, transform_indices = @transform_2, window_bounds = array<i64: 128, 128>}, {transform_indices = @transform_3, window_bounds = array<i64: 16, 128>}]} {
    %c0 = arith.constant 0 : index
    %c0_0 = arith.constant 0 : index
    %0 = vector.load %arg1[%c0, %c0_0] : memref<16x128xbf16, #tpu.memory_space<vmem>>, vector<16x128xbf16>
    %c0_1 = arith.constant 0 : index
    %c0_2 = arith.constant 0 : index
    %1 = vector.load %arg2[%c0_1, %c0_2] : memref<128x128xbf16, #tpu.memory_space<vmem>>, vector<128x128xbf16>
    %c0_3 = arith.constant 0 : index
    %c0_4 = arith.constant 0 : index
    %2 = vector.load %arg3[%c0_3, %c0_4] : memref<128x128xbf16, #tpu.memory_space<vmem>>, vector<128x128xbf16>
    %cst = arith.constant dense<0.000000e+00> : vector<16x128xf32>
    %3 = tpu.matmul %0, %1, %cst {dimension_numbers = #tpu.dot_dimension_numbers<[1], [0], [0], [1], [0, 0, 1, 1], [], []>} : vector<16x128xbf16>, vector<128x128xbf16>, vector<16x128xf32> -> vector<16x128xf32>
    %cst_5 = arith.constant 0.000000e+00 : f32
    %4 = vector.broadcast %cst_5 : f32 to vector<16x128xf32>
    %5 = arith.maximumf %3, %4 : vector<16x128xf32>
    %6 = arith.truncf %5 : vector<16x128xf32> to vector<16x128xbf16>
    %cst_6 = arith.constant dense<0.000000e+00> : vector<16x128xf32>
    %7 = tpu.matmul %6, %2, %cst_6 {dimension_numbers = #tpu.dot_dimension_numbers<[1], [0], [0], [1], [0, 0, 1, 1], [], []>} : vector<16x128xbf16>, vector<128x128xbf16>, vector<16x128xf32> -> vector<16x128xf32>
    %c0_7 = arith.constant 0 : index
    %c0_8 = arith.constant 0 : index
    %8 = vector.load %arg4[%c0_7, %c0_8] : memref<16x128xf32, #tpu.memory_space<vmem>>, vector<16x128xf32>
    tpu.vector_store %arg4[%c0_7, %c0_8], %7 {strides = array<i32>} : memref<16x128xf32, #tpu.memory_space<vmem>>, vector<16x128xf32>,
    return
  }
  func.func @transform_0(%arg0: i32) -> (i32, i32) {
    %c0_i32 = arith.constant 0 : i32
    %c0_i32_0 = arith.constant 0 : i32
    return %arg0, %c0_i32 : i32, i32
  }
  func.func @transform_1(%arg0: i32) -> (i32, i32) {
    %c0_i32 = arith.constant 0 : i32
    %c0_i32_0 = arith.constant 0 : i32
    %c0_i32_1 = arith.constant 0 : i32
    return %c0_i32, %c0_i32_0 : i32, i32
  }
  func.func @transform_2(%arg0: i32) -> (i32, i32) {
    %c0_i32 = arith.constant 0 : i32
    %c0_i32_0 = arith.constant 0 : i32
    %c0_i32_1 = arith.constant 0 : i32
    return %c0_i32, %c0_i32_0 : i32, i32
  }
  func.func @transform_3(%arg0: i32) -> (i32, i32) {
    %c0_i32 = arith.constant 0 : i32
    %c0_i32_0 = arith.constant 0 : i32
    return %arg0, %c0_i32 : i32, i32
  }
}

</mosaic_0001>

<llo_original>
// kernel: tpu_custom_call.1
$region0: #{tpu_custom_call.1}
  #allocation0 [shape = 'u32[]', space=smem, size = 0x4, offset = 0x4, fixed_abs, tag = 'smem constant byte address 0x4 - core index']
  #allocation1 [shape = 'u32[144,128]{1,0:T(1,128)}', space=vmem, size = 0x12000, scoped, tag = 'internal scratch']
  %s0 = inlined_call_operand.hbm [shape: bf16[16,128], index: 0, kind: input, shape index: {}]
  %s1 = inlined_call_operand.hbm [shape: bf16[128,128], index: 1, kind: input, shape index: {}]
  %s2 = inlined_call_operand.hbm [shape: bf16[128,128], index: 2, kind: input, shape index: {}]
  %s3 = inlined_call_operand.hbm [shape: f32[16,128], index: 3, kind: output, shape index: {}]
  %s4 = sld [smem:[#allocation0]]
  $region34: #{tpu_custom_call.1} parent=0
    _
  %s6 = ssub.s32 1, %s4
  %s7 = scalar_select 0, %s6, %s4
  $region1: #{tpu_custom_call.1} parent=0
    #allocation2 [shape = 'u8[4096]{0}', space=vmem, size = 0x1000, scoped, tag = 'input window, operand 0, single buffered']
    #allocation3 [shape = 's32[1]{0}', space=sflag, size = 0x4, scoped, tag = 'scoped memory for tpu_custom_call.1']
    #allocation4 [shape = 's32[1]{0}', space=sflag, size = 0x4, scoped, tag = 'scoped memory for tpu_custom_call.1']
    #allocation5 [shape = 'u8[32768]{0}', space=vmem, size = 0x8000, scoped, tag = 'input window, operand 1, single buffered']
    #allocation6 [shape = 's32[1]{0}', space=sflag, size = 0x4, scoped, tag = 'scoped memory for tpu_custom_call.1']
    #allocation7 [shape = 'u8[32768]{0}', space=vmem, size = 0x8000, scoped, tag = 'input window, operand 2, single buffered']
    #allocation8 [shape = 'u8[8192]{0}', space=vmem, size = 0x2000, scoped, tag = 'output window, operand 0, single buffered']
    %8 = vsyncpa [#allocation3], 0
    %9 = vsyncpa [#allocation6], 0
    %10 = vsyncpa [#allocation4], 0
    // Predicated region
    $region2: #{tpu_custom_call.1} parent=1 // pred_check
      _
    $region3: #{tpu_custom_call.1} parent=1 // pred_check_branch
      %12 = sbr.rel (0) target = $region5
    $region4: #{tpu_custom_call.1} parent=1 // pred_region
      %s14 = ssub.s32 128, 128
      %15 = vsyncadd [#allocation3], %s14
      %s16 = sshll.u32 [#allocation2], 4
      %s17 = int_to_ptr.vmem [resolvable:$true] %s16
      %22 = dma.hbm_to_vmem [thread:$0]  %s0, 128, %s17, [#allocation3], 64, 64, 4
    $region5: #{tpu_custom_call.1} parent=1 // pred_fallthru
      _
    // Predicated region
    $region6: #{tpu_custom_call.1} parent=1 // pred_check
      _
    $region7: #{tpu_custom_call.1} parent=1 // pred_check_branch
      %24 = sbr.rel (0) target = $region9
    $region8: #{tpu_custom_call.1} parent=1 // pred_region
      %s26 = ssub.s32 1024, 1024
      %27 = vsyncadd [#allocation6], %s26
      %s28 = sshll.u32 [#allocation5], 4
      %s29 = int_to_ptr.vmem [resolvable:$true] %s28
      %34 = dma.hbm_to_vmem [thread:$0]  %s1, 1024, %s29, [#allocation6], 64, 64, 4
    $region9: #{tpu_custom_call.1} parent=1 // pred_fallthru
      _
    // Predicated region
    $region10: #{tpu_custom_call.1} parent=1 // pred_check
      _
    $region11: #{tpu_custom_call.1} parent=1 // pred_check_branch
      %36 = sbr.rel (0) target = $region13
    $region12: #{tpu_custom_call.1} parent=1 // pred_region
      %s38 = ssub.s32 1024, 1024
      %39 = vsyncadd [#allocation6], %s38
      %s40 = sshll.u32 [#allocation7], 4
      %s41 = int_to_ptr.vmem [resolvable:$true] %s40
      %46 = dma.hbm_to_vmem [thread:$0]  %s2, 1024, %s41, [#allocation6], 64, 64, 4
    $region13: #{tpu_custom_call.1} parent=1 // pred_fallthru
      _
    // Predicated region
    $region14: #{tpu_custom_call.1} parent=1 // pred_check
      _
    $region15: #{tpu_custom_call.1} parent=1 // pred_check_branch
      %48 = sbr.rel (0) target = $region17
    $region16: #{tpu_custom_call.1} parent=1 // pred_region
      %49 = dma.done [#allocation3], 128
    $region17: #{tpu_custom_call.1} parent=1 // pred_fallthru
      _
    // Predicated region
    $region18: #{tpu_custom_call.1} parent=1 // pred_check
      _
    $region19: #{tpu_custom_call.1} parent=1 // pred_check_branch
      %51 = sbr.rel (0) target = $region21
    $region20: #{tpu_custom_call.1} parent=1 // pred_region
      %52 = dma.done [#allocation6], 1024
    $region21: #{tpu_custom_call.1} parent=1 // pred_fallthru
      _
    // Predicated region
    $region22: #{tpu_custom_call.1} parent=1 // pred_check
      _
    $region23: #{tpu_custom_call.1} parent=1 // pred_check_branch
      %54 = sbr.rel (0) target = $region25
    $region24: #{tpu_custom_call.1} parent=1 // pred_region
      %55 = dma.done [#allocation6], 1024
    $region25: #{tpu_custom_call.1} parent=1 // pred_fallthru
      _
    %v57 = vld [vmem:[#allocation2] sm:$0xf]
    %v58 = vld [vmem:[#allocation2 + $0x4] sm:$0xf]
    %v59 = vld [vmem:[#allocation5] sm:$0xf]
    %v60 = vld [vmem:[#allocation5 + $0x4] sm:$0xf]
    %v61 = vld [vmem:[#allocation5 + $0x8] sm:$0xf]
    %v62 = vld [vmem:[#allocation5 + $0xc] sm:$0xf]
    %v63 = vld [vmem:[#allocation5 + $0x10] sm:$0xf]
    %v64 = vld [vmem:[#allocation5 + $0x14] sm:$0xf]
    %v65 = vld [vmem:[#allocation5 + $0x18] sm:$0xf]
    %v66 = vld [vmem:[#allocation5 + $0x1c] sm:$0xf]
    %v67 = vld [vmem:[#allocation5 + $0x20] sm:$0xf]
    %v68 = vld [vmem:[#allocation5 + $0x24] sm:$0xf]
    %v69 = vld [vmem:[#allocation5 + $0x28] sm:$0xf]
    %v70 = vld [vmem:[#allocation5 + $0x2c] sm:$0xf]
    %v71 = vld [vmem:[#allocation5 + $0x30] sm:$0xf]
    %v72 = vld [vmem:[#allocation5 + $0x34] sm:$0xf]
    %v73 = vld [vmem:[#allocation5 + $0x38] sm:$0xf]
    %v74 = vld [vmem:[#allocation5 + $0x3c] sm:$0xf]
    %v75 = vld [vmem:[#allocation7] sm:$0xf]
    %v76 = vld [vmem:[#allocation7 + $0x4] sm:$0xf]
    %v77 = vld [vmem:[#allocation7 + $0x8] sm:$0xf]
    %v78 = vld [vmem:[#allocation7 + $0xc] sm:$0xf]
    %v79 = vld [vmem:[#allocation7 + $0x10] sm:$0xf]
    %v80 = vld [vmem:[#allocation7 + $0x14] sm:$0xf]
    %v81 = vld [vmem:[#allocation7 + $0x18] sm:$0xf]
    %v82 = vld [vmem:[#allocation7 + $0x1c] sm:$0xf]
    %v83 = vld [vmem:[#allocation7 + $0x20] sm:$0xf]
    %v84 = vld [vmem:[#allocation7 + $0x24] sm:$0xf]
    %v85 = vld [vmem:[#allocation7 + $0x28] sm:$0xf]
    %v86 = vld [vmem:[#allocation7 + $0x2c] sm:$0xf]
    %v87 = vld [vmem:[#allocation7 + $0x30] sm:$0xf]
    %v88 = vld [vmem:[#allocation7 + $0x34] sm:$0xf]
    %v89 = vld [vmem:[#allocation7 + $0x38] sm:$0xf]
    %v90 = vld [vmem:[#allocation7 + $0x3c] sm:$0xf]
    %v93 = vunpack.c.l.b16 %v57
    %v94 = vunpack.c.l.b16 %v58
    %v95 = vpack.c.b16 %v94, %v93
    %v113 = vunpack.c.l.b16 %v59
    %v114 = vunpack.c.l.b16 %v60
    %v115 = vunpack.c.l.b16 %v61
    %v116 = vunpack.c.l.b16 %v62
    %v117 = vunpack.c.l.b16 %v63
    %v118 = vunpack.c.l.b16 %v64
    %v119 = vunpack.c.l.b16 %v65
    %v120 = vunpack.c.l.b16 %v66
    %v121 = vunpack.c.l.b16 %v67
    %v122 = vunpack.c.l.b16 %v68
    %v123 = vunpack.c.l.b16 %v69
    %v124 = vunpack.c.l.b16 %v70
    %v125 = vunpack.c.l.b16 %v71
    %v126 = vunpack.c.l.b16 %v72
    %v127 = vunpack.c.l.b16 %v73
    %v128 = vunpack.c.l.b16 %v74
    %v129 = vpack.c.b16 %v114, %v113
    %v130 = vpack.c.b16 %v116, %v115
    %v131 = vpack.c.b16 %v118, %v117
    %v132 = vpack.c.b16 %v120, %v119
    %v133 = vpack.c.b16 %v122, %v121
    %v134 = vpack.c.b16 %v124, %v123
    %v135 = vpack.c.b16 %v126, %v125
    %v136 = vpack.c.b16 %v128, %v127
    %145 = vmatprep.subr.bf16.mxu0 0
    %146 = vmatpush1.bf16.msra.mxu0 %v136
    %147 = vmatprep.subr.bf16.mxu0 0
    %148 = vmatpush1.bf16.msra.mxu0 %v135
    %149 = vmatprep.subr.bf16.mxu0 0
    %150 = vmatpush1.bf16.msra.mxu0 %v134
    %151 = vmatprep.subr.bf16.mxu0 0
    %152 = vmatpush1.bf16.msra.mxu0 %v133
    %153 = vmatprep.subr.bf16.mxu0 0
    %154 = vmatpush1.bf16.msra.mxu0 %v132
    %155 = vmatprep.subr.bf16.mxu0 0
    %156 = vmatpush1.bf16.msra.mxu0 %v131
    %157 = vmatprep.subr.bf16.mxu0 0
    %158 = vmatpush1.bf16.msra.mxu0 %v130
    %159 = vmatprep.subr.bf16.mxu0 0
    %160 = vmatpush1.bf16.msra.mxu0 %v129
    %161 = vmatprep.subr.bf16.mxu0 0
    %162 = vmatpush2.bf16.msra.mxu0 0
    %163 = vmatprep.subr.bf16.mxu0 0
    %164 = vmatpush2.bf16.msra.mxu0 0
    %165 = vmatprep.subr.bf16.mxu0 0
    %166 = vmatpush2.bf16.msra.mxu0 0
    %167 = vmatprep.subr.bf16.mxu0 0
    %168 = vmatpush2.bf16.msra.mxu0 0
    %169 = vmatprep.subr.bf16.mxu0 0
    %170 = vmatpush2.bf16.msra.mxu0 0
    %171 = vmatprep.subr.bf16.mxu0 0
    %172 = vmatpush2.bf16.msra.mxu0 0
    %173 = vmatprep.subr.bf16.mxu0 0
    %174 = vmatpush2.bf16.msra.mxu0 0
    %175 = vmatprep.subr.bf16.mxu0 0
    %176 = vmatpush2.bf16.msra.mxu0 0
    %177 = vmatprep.mubr.bf16.mxu0 0
    %178 = vmatmul.mubr.bf16.gmra.mxu0 %v95
    %v179 = vpop.f32.mrf.mxu0
    %v180 = vadd.f32 0.0, %v179
    %v181 = vpop.f32.mrf.mxu0
    %v182 = vpop.f32.mrf.mxu0
    %v183 = vadd.f32 0.0, %v182
    %v184 = vpop.f32.mrf.mxu0
    %185 = vdwg.mxu0
    %v186 = vmax.f32 %v180, 0.0
    %v187 = vmax.f32 %v183, 0.0
    %v188 = vpack.c.bf16 %v187, %v186
    %v205 = vunpack.c.l.b16 %v75
    %v206 = vunpack.c.l.b16 %v76
    %v207 = vunpack.c.l.b16 %v77
    %v208 = vunpack.c.l.b16 %v78
    %v209 = vunpack.c.l.b16 %v79
    %v210 = vunpack.c.l.b16 %v80
    %v211 = vunpack.c.l.b16 %v81
    %v212 = vunpack.c.l.b16 %v82
    %v213 = vunpack.c.l.b16 %v83
    %v214 = vunpack.c.l.b16 %v84
    %v215 = vunpack.c.l.b16 %v85
    %v216 = vunpack.c.l.b16 %v86
    %v217 = vunpack.c.l.b16 %v87
    %v218 = vunpack.c.l.b16 %v88
    %v219 = vunpack.c.l.b16 %v89
    %v220 = vunpack.c.l.b16 %v90
    %v221 = vpack.c.b16 %v206, %v205
    %v222 = vpack.c.b16 %v208, %v207
    %v223 = vpack.c.b16 %v210, %v209
    %v224 = vpack.c.b16 %v212, %v211
    %v225 = vpack.c.b16 %v214, %v213
    %v226 = vpack.c.b16 %v216, %v215
    %v227 = vpack.c.b16 %v218, %v217
    %v228 = vpack.c.b16 %v220, %v219
    %237 = vmatprep.subr.bf16.mxu0 0
    %238 = vmatpush1.bf16.msra.mxu0 %v228
    %239 = vmatprep.subr.bf16.mxu0 0
    %240 = vmatpush1.bf16.msra.mxu0 %v227
    %241 = vmatprep.subr.bf16.mxu0 0
    %242 = vmatpush1.bf16.msra.mxu0 %v226
    %243 = vmatprep.subr.bf16.mxu0 0
    %244 = vmatpush1.bf16.msra.mxu0 %v225
    %245 = vmatprep.subr.bf16.mxu0 0
    %246 = vmatpush1.bf16.msra.mxu0 %v224
    %247 = vmatprep.subr.bf16.mxu0 0
    %248 = vmatpush1.bf16.msra.mxu0 %v223
    %249 = vmatprep.subr.bf16.mxu0 0
    %250 = vmatpush1.bf16.msra.mxu0 %v222
    %251 = vmatprep.subr.bf16.mxu0 0
    %252 = vmatpush1.bf16.msra.mxu0 %v221
    %253 = vmatprep.subr.bf16.mxu0 0
    %254 = vmatpush2.bf16.msra.mxu0 0
    %255 = vmatprep.subr.bf16.mxu0 0
    %256 = vmatpush2.bf16.msra.mxu0 0
    %257 = vmatprep.subr.bf16.mxu0 0
    %258 = vmatpush2.bf16.msra.mxu0 0
    %259 = vmatprep.subr.bf16.mxu0 0
    %260 = vmatpush2.bf16.msra.mxu0 0
    %261 = vmatprep.subr.bf16.mxu0 0
    %262 = vmatpush2.bf16.msra.mxu0 0
    %263 = vmatprep.subr.bf16.mxu0 0
    %264 = vmatpush2.bf16.msra.mxu0 0
    %265 = vmatprep.subr.bf16.mxu0 0
    %266 = vmatpush2.bf16.msra.mxu0 0
    %267 = vmatprep.subr.bf16.mxu0 0
    %268 = vmatpush2.bf16.msra.mxu0 0
    %269 = vmatprep.mubr.bf16.mxu0 0
    %270 = vmatmul.mubr.bf16.gmra.mxu0 %v188
    %v271 = vpop.f32.mrf.mxu0
    %v272 = vadd.f32 0.0, %v271
    %v273 = vpop.f32.mrf.mxu0
    %v274 = vpop.f32.mrf.mxu0
    %v275 = vadd.f32 0.0, %v274
    %v276 = vpop.f32.mrf.mxu0
    %277 = vdwg.mxu0
    %278 = vst [vmem:[#allocation8] sm:$0xff] %v272
    %279 = vst [vmem:[#allocation8 + $0x8] sm:$0xff] %v275
    // Predicated region
    $region26: #{tpu_custom_call.1} parent=1 // pred_check
      _
    $region27: #{tpu_custom_call.1} parent=1 // pred_check_branch
      %281 = sbr.rel (0) target = $region29
    $region28: #{tpu_custom_call.1} parent=1 // pred_region
      %s283 = ssub.s32 256, 256
      %284 = vsyncadd [#allocation4], %s283
      %s285 = sshll.u32 [#allocation8], 4
      %s286 = int_to_ptr.vmem [resolvable:$true] %s285
      %291 = dma.vmem_to_hbm [thread:$0]  %s286, 256, %s3, [#allocation4], 128, 128, 8
    $region29: #{tpu_custom_call.1} parent=1 // pred_fallthru
      _
    // Predicated region
    $region30: #{tpu_custom_call.1} parent=1 // pred_check
      _
    $region31: #{tpu_custom_call.1} parent=1 // pred_check_branch
      %293 = sbr.rel (0) target = $region33
    $region32: #{tpu_custom_call.1} parent=1 // pred_region
      %294 = dma.done [#allocation4], 256
    $region33: #{tpu_custom_call.1} parent=1 // pred_fallthru
      _
    %295 = vsyncpa [#allocation3], 1
    %296 = vsyncpa [#allocation6], 1
    %297 = vsyncpa [#allocation4], 1

</llo_original>
